<compile_context>
chip_gen: v5e
topology: v5e:2x2
jax: 0.10.0
libtpu: 0.0.40
codegen_flags: <defaults>
</compile_context>

<pallas_src>
import math
import functools

import jax
import jax.numpy as jnp
from jax.experimental import pallas as pl
from jax.experimental.pallas import tpu as pltpu

# ---------------------------- model hyper-parameters ----------------------------
VOCAB_SIZE  = 64
D_MODEL     = 32
PADDING_IDX = 0
B           = 2
T           = 8

_MAX_TILE_T = 128   # rows gathered per grid step (= max outstanding row DMAs per step)


# ---------------------------- the Pallas kernel ----------------------------
def _embedding_gather_kernel(ids_ref, table_hbm, out_ref, row_buf, sems,
                             *, tile_t, vocab, scale):
    """One grid step gathers `tile_t` embedding rows from the HBM-resident table.

    ids_ref:   (n_pad,) int32, SMEM (scalar prefetch)       -- all token ids
    table_hbm: (V, D)   f32,  memory_space=pl.ANY (HBM)     -- embedding table
    out_ref:   (tile_t, D) f32 VMEM block                    -- this step's output tile
    row_buf:   (tile_t, D) f32 VMEM scratch                  -- DMA landing buffer
    sems:      (tile_t,) DMA semaphores                      -- one per outstanding row copy
    """
    base = pl.program_id(0) * tile_t

    def _row_copy(r):
        tok = ids_ref[base + r]
        # Memory-safety clamp: PyTorch raises on out-of-range ids; here we clamp so an
        # invalid id can never turn into an out-of-bounds DMA.
        tok = jnp.minimum(jnp.maximum(tok, 0), vocab - 1)
        return pltpu.make_async_copy(
            table_hbm.at[pl.ds(tok, 1), :],
            row_buf.at[pl.ds(r, 1), :],
            sems.at[r],
        )

    # Issue every row-gather DMA of the tile up front (tile_t outstanding copies) ...
    @pl.loop(0, tile_t)
    def _(r):
        _row_copy(r).start()

    # ... then drain them.
    @pl.loop(0, tile_t)
    def _(r):
        _row_copy(r).wait()

    # Fused sqrt(d_model) scaling on the gathered tile (single VPU pass).
    out_ref[...] = row_buf[...] * scale


# ---------------------------- wrapper ----------------------------
def embedding_forward(token_ids, table):
    assert token_ids.ndim == 2, (
        f"Expected: (batch size, max token sequence length), got {token_ids.shape}"
    )
    b, t = token_ids.shape
    vocab, d_model = table.shape
    n_tok = b * t

    # Token tile: multiple of 8 (sublane granularity), capped at _MAX_TILE_T.
    tile_t = min(_MAX_TILE_T, ((n_tok + 7) // 8) * 8)
    n_pad = pl.cdiv(n_tok, tile_t) * tile_t

    ids = token_ids.reshape(n_tok).astype(jnp.int32)
    if n_pad != n_tok:
        # Padded slots gather row 0; their output rows are sliced off below.
        ids = jnp.pad(ids, (0, n_pad - n_tok))

    kernel = functools.partial(
        _embedding_gather_kernel,
        tile_t=tile_t, vocab=vocab, scale=math.sqrt(d_model))

    out = pl.pallas_call(
        kernel,
        out_shape=jax.ShapeDtypeStruct((n_pad, d_model), jnp.float32),
        grid_spec=pltpu.PrefetchScalarGridSpec(
            num_scalar_prefetch=1,                           # ids -> SMEM
            grid=(n_pad // tile_t,),
            in_specs=[pl.BlockSpec(memory_space=pl.ANY)],    # table stays in HBM
            out_specs=pl.BlockSpec((tile_t, d_model), lambda i, ids_ref: (i, 0)),
            scratch_shapes=[
                pltpu.VMEM((tile_t, d_model), jnp.float32),
                pltpu.SemaphoreType.DMA((tile_t,)),
            ],
        ),
        compiler_params=pltpu.CompilerParams(
            # Token tiles are independent -> shard across v7x's two TensorCores.
            dimension_semantics=("parallel",),
        ),
    )(ids, table)

    return out[:n_tok].reshape(b, t, d_model)


# ---------------------------- deterministic parameter init ----------------------------
def init_table(key):
    # nn.Embedding default init: N(0, 1); the padding_idx row is zeroed.
    # TODO(synk): PyTorch also keeps the padding row frozen during training; gradient
    #             handling is outside this forward-pass kernel's scope.
    table = jax.random.normal(key, (VOCAB_SIZE, D_MODEL), jnp.float32)
    table = table.at[PADDING_IDX, :].set(0.0)
    return table


# ---------------------------- pure-JAX reference ----------------------------
def reference(token_ids, table):
    return table[token_ids] * math.sqrt(table.shape[1])


if __name__ == "__main__":
    key = jax.random.PRNGKey(0)
    k_table, k_ids = jax.random.split(key)

    table = init_table(k_table)
    token_ids = jax.random.randint(k_ids, (B, T), 0, VOCAB_SIZE, dtype=jnp.int32)
    # Make sure a few padding tokens are present to exercise the zeroed padding row.
    token_ids = token_ids.at[0, 0].set(PADDING_IDX)
    token_ids = token_ids.at[1, T - 1].set(PADDING_IDX)

    out = embedding_forward(token_ids, table)
    out = jax.block_until_ready(out)

    ref = reference(token_ids, table)
    assert out.shape == (B, T, D_MODEL)
    assert jnp.allclose(out, ref, atol=1e-6, rtol=1e-6), "mismatch vs pure-JAX reference"
    # Padding rows must be exactly zero.
    assert jnp.all(out[0, 0] == 0.0) and jnp.all(out[1, T - 1] == 0.0)

    print("KERNEL_OK")
</pallas_src>

<mosaic_0001>
module attributes {stable_mosaic.version = 11 : i64} {
  func.func @_embedding_gather_kernel(%arg0: i32, %arg1: memref<16xi32, #tpu.memory_space<smem>>, %arg2: memref<64x32xf32, #tpu.memory_space<any>>, %arg3: memref<16x32xf32, #tpu.memory_space<vmem>>, %arg4: memref<16x32xf32, #tpu.memory_space<vmem>>, %arg5: memref<16x!tpu.dma_semaphore, #tpu.memory_space<semaphore_mem>>) attributes {dimension_semantics = [#tpu.dimension_semantics<parallel>], iteration_bounds = array<i64: 1>, scalar_prefetch = 1 : i64, scratch_operands = 2 : i64, tpu.core_type = #tpu.core_type<tc>, window_params = [{}, {transform_indices = @transform_1, window_bounds = array<i64: 16, 32>}]} {
    %c16_i32 = arith.constant 16 : i32
    %0 = arith.muli %arg0, %c16_i32 : i32
    %c0_i32 = arith.constant 0 : i32
    %c16_i32_0 = arith.constant 16 : i32
    %1 = arith.addi %c0_i32, %c16_i32_0 : i32
    %c1_i32 = arith.constant 1 : i32
    scf.for %arg6 = %c0_i32 to %1 step %c1_i32  : i32 {
      %c1_i32_9 = arith.constant 1 : i32
      %7 = arith.muli %arg6, %c1_i32_9 : i32
      %c0_i32_10 = arith.constant 0 : i32
      %8 = arith.addi %c0_i32_10, %7 : i32
      %9 = arith.addi %0, %8 : i32
      %10 = arith.index_cast %9 : i32 to index
      %11 = memref.load %arg1[%10] : memref<16xi32, #tpu.memory_space<smem>>
      %c0_i32_11 = arith.constant 0 : i32
      %12 = arith.maxsi %11, %c0_i32_11 : i32
      %c63_i32 = arith.constant 63 : i32
      %13 = arith.minsi %12, %c63_i32 : i32
      %c0_i32_12 = arith.constant 0 : i32
      %14 = tpu.memref_slice %arg2[%13, %c0_i32_12] : memref<64x32xf32, #tpu.memory_space<any>> -> memref<1x32xf32, #tpu.memory_space<any>>
      %c0_i32_13 = arith.constant 0 : i32
      %15 = tpu.memref_slice %arg4[%8, %c0_i32_13] : memref<16x32xf32, #tpu.memory_space<vmem>> -> memref<1x32xf32, #tpu.memory_space<vmem>>
      %16 = tpu.memref_slice %arg5[%8] : memref<16x!tpu.dma_semaphore, #tpu.memory_space<semaphore_mem>> -> memref<1x!tpu.dma_semaphore, #tpu.memory_space<semaphore_mem>>
      %17 = tpu.memref_squeeze %16 : memref<1x!tpu.dma_semaphore, #tpu.memory_space<semaphore_mem>> -> memref<!tpu.dma_semaphore, #tpu.memory_space<semaphore_mem>>
      tpu.enqueue_dma source(%14 : memref<1x32xf32, #tpu.memory_space<any>>) target(%15 : memref<1x32xf32, #tpu.memory_space<vmem>>) target_semaphore(%17 : memref<!tpu.dma_semaphore, #tpu.memory_space<semaphore_mem>>)
    }
    %c16_i32_1 = arith.constant 16 : i32
    %c0_i32_2 = arith.constant 0 : i32
    %c16_i32_3 = arith.constant 16 : i32
    %2 = arith.addi %c0_i32_2, %c16_i32_3 : i32
    %c1_i32_4 = arith.constant 1 : i32
    scf.for %arg6 = %c0_i32_2 to %2 step %c1_i32_4  : i32 {
      %c1_i32_9 = arith.constant 1 : i32
      %7 = arith.muli %arg6, %c1_i32_9 : i32
      %c0_i32_10 = arith.constant 0 : i32
      %8 = arith.addi %c0_i32_10, %7 : i32
      %9 = arith.addi %0, %8 : i32
      %10 = arith.index_cast %9 : i32 to index
      %11 = memref.load %arg1[%10] : memref<16xi32, #tpu.memory_space<smem>>
      %c0_i32_11 = arith.constant 0 : i32
      %12 = arith.maxsi %11, %c0_i32_11 : i32
      %c63_i32 = arith.constant 63 : i32
      %13 = arith.minsi %12, %c63_i32 : i32
      %c0_i32_12 = arith.constant 0 : i32
      %14 = tpu.memref_slice %arg2[%13, %c0_i32_12] : memref<64x32xf32, #tpu.memory_space<any>> -> memref<1x32xf32, #tpu.memory_space<any>>
      %c0_i32_13 = arith.constant 0 : i32
      %15 = tpu.memref_slice %arg4[%8, %c0_i32_13] : memref<16x32xf32, #tpu.memory_space<vmem>> -> memref<1x32xf32, #tpu.memory_space<vmem>>
      %16 = tpu.memref_slice %arg5[%8] : memref<16x!tpu.dma_semaphore, #tpu.memory_space<semaphore_mem>> -> memref<1x!tpu.dma_semaphore, #tpu.memory_space<semaphore_mem>>
      %17 = tpu.memref_squeeze %16 : memref<1x!tpu.dma_semaphore, #tpu.memory_space<semaphore_mem>> -> memref<!tpu.dma_semaphore, #tpu.memory_space<semaphore_mem>>
      tpu.wait_dma2 semaphore(%17 : memref<!tpu.dma_semaphore, #tpu.memory_space<semaphore_mem>>) src(%14 : memref<1x32xf32, #tpu.memory_space<any>>) dst(%15 : memref<1x32xf32, #tpu.memory_space<vmem>>)
    }
    %c16_i32_5 = arith.constant 16 : i32
    %c0 = arith.constant 0 : index
    %c0_6 = arith.constant 0 : index
    %3 = vector.load %arg4[%c0, %c0_6] : memref<16x32xf32, #tpu.memory_space<vmem>>, vector<16x32xf32>
    %cst = arith.constant 5.65685415 : f32
    %4 = vector.broadcast %cst : f32 to vector<16x32xf32>
    %5 = arith.mulf %3, %4 : vector<16x32xf32>
    %c0_7 = arith.constant 0 : index
    %c0_8 = arith.constant 0 : index
    %6 = vector.load %arg3[%c0_7, %c0_8] : memref<16x32xf32, #tpu.memory_space<vmem>>, vector<16x32xf32>
    tpu.vector_store %arg3[%c0_7, %c0_8], %5 {strides = array<i32>} : memref<16x32xf32, #tpu.memory_space<vmem>>, vector<16x32xf32>,
    return
  }
  func.func @transform_1(%arg0: i32, %arg1: memref<16xi32, #tpu.memory_space<smem>>) -> (i32, i32) {
    %c0_i32 = arith.constant 0 : i32
    %c0_i32_0 = arith.constant 0 : i32
    return %arg0, %c0_i32 : i32, i32
  }
}

</mosaic_0001>

<llo_original>
// kernel: tpu_custom_call.1
$region0: #{tpu_custom_call.1}
  #allocation0 [shape = 'u32[]', space=smem, size = 0x4, offset = 0x4, fixed_abs, tag = 'smem constant byte address 0x4 - core index']
  #allocation1 [shape = 'u32[72,128]{1,0:T(1,128)}', space=vmem, size = 0x9000, scoped, tag = 'internal scratch']
  #allocation2 [shape = 'f32[16,32]{1,0:T(8,128)}', space=vmem, size = 0x2000, scoped, tag = 'scratch operand']
  #allocation3 [shape = 's32[16]{0}', space=sflag, size = 0x40, scoped, tag = 'scratch operand']
  #allocation4 [shape = 's32[1]{0}', space=sflag, size = 0x4, scoped, tag = 'scoped memory for tpu_custom_call.1']
  #allocation5 [shape = 'u8[512]{0}', space=smem, size = 0x200, scoped, tag = 'prefetched SMEM operand 0']
  #allocation8 [shape = 's32[]', space=sflag, size = 0x4, offset = 0, fixed_abs, tag = 'sflag constant byte address 0x0 - dummy sync flag']
  %s0 = inlined_call_operand.vmem [shape: s32[16], index: 0, kind: input, shape index: {}]
  %s1 = inlined_call_operand.vmem [shape: f32[64,32], index: 1, kind: input, shape index: {}]
  %s2 = inlined_call_operand.hbm [shape: f32[16,32], index: 2, kind: output, shape index: {}]
  %s3 = sld [smem:[#allocation0]]
  $region54: #{tpu_custom_call.1} parent=0
    _
  %s5 = ssub.s32 1, %s3
  %s6 = scalar_select 0, %s5, %s3
  %s8 = sshll.u32 %s0, 4
  %s9 = int_to_ptr.vmem [resolvable:$true] %s8
  %11 = dma.vmem_to_smem %s9, 16, [#allocation5], [#allocation4]
  %13 = dma.done [#allocation4], 16
  %14 = sfence
  $region1: #{tpu_custom_call.1} parent=0
    #allocation6 [shape = 'u8[8192]{0}', space=vmem, size = 0x2000, scoped, tag = 'output window, operand 0, single buffered']
    #allocation7 [shape = 's32[1]{0}', space=sflag, size = 0x4, scoped, tag = 'scoped memory for tpu_custom_call.1']
    %15 = vsyncpa [#allocation7], 0
    %s16 = smul.u32 0, 16
    loop: start=0, step=1, limit=16
    $region2: #{tpu_custom_call.1} parent=1 // loop_pre_header
      _
    $region3: #{tpu_custom_call.1} parent=1 // loop_header
      %s18 = sphi 0, %s22
      %p19 = scmp.ge.s32.totalorder %s18, 16
    $region4: #{tpu_custom_call.1} parent=1 // loop_header_branch
      %21 = sbr.rel (%p19) target = $region8
    $region5: #{tpu_custom_call.1} parent=1 // loop_body
      %s23 = sadd.s32 %s16, %s18
      %s24 = sld [smem:[#allocation5 + %s23]]
      %p25 = scmp.gt.s32.totalorder %s24, 0
      %s26 = scalar_select %p25, %s24, 0
      %p27 = scmp.lt.s32.totalorder %s26, 63
      %s28 = scalar_select %p27, %s26, 63
      %s29 = scalar_lea.vmem %s1, %s28
      %s30 = scalar_lea.vmem [#allocation2], %s18
      %s31 = scalar_lea.sflag [#allocation3], %s18
      // Predicated region
      $region9: #{tpu_custom_call.1} parent=5 // pred_check
        _
      $region10: #{tpu_custom_call.1} parent=5 // pred_check_branch
        %33 = sbr.rel target = $region12
      $region11: #{tpu_custom_call.1} parent=5 // pred_region
        // Predicated region
        $region24: #{tpu_custom_call.1} parent=11 // pred_check
          _
        $region25: #{tpu_custom_call.1} parent=11 // pred_check_branch
          %49 = sbr.rel (0) target = $region27
        $region26: #{tpu_custom_call.1} parent=11 // pred_region
          %s51 = ssub.s32 2, 1
          loop: start=0, step=1, limit=1
          $region28: #{tpu_custom_call.1} parent=26 // loop_pre_header
            _
          $region29: #{tpu_custom_call.1} parent=26 // loop_header
            %s53 = sphi 0, %s57
            %p54 = scmp.ge.s32.totalorder %s53, 1
            %s58 = sphi %s29, %s29
            %s59 = sphi %s30, %s30
          $region30: #{tpu_custom_call.1} parent=26 // loop_header_branch
            %56 = sbr.rel (%p54) target = $region34
          $region31: #{tpu_custom_call.1} parent=26 // loop_body
            %v60 = vld [vmem:[%s58] sm:%s51]
            %61 = vst [vmem:[%s59] sm:%s51] %v60
          $region32: #{tpu_custom_call.1} parent=26 // loop_footer
            %s57 = sadd.s32 1, %s53
          $region33: #{tpu_custom_call.1} parent=26 // loop_footer_branch
            %52 = sbr.rel target = $region29
          $region34: #{tpu_custom_call.1} parent=26 // loop_exit
            _
        $region27: #{tpu_custom_call.1} parent=11 // pred_fallthru
          _
      $region12: #{tpu_custom_call.1} parent=5 // pred_fallthru
        _
      // Predicated region
      $region13: #{tpu_custom_call.1} parent=5 // pred_check
        _
      $region14: #{tpu_custom_call.1} parent=5 // pred_check_branch
        %35 = sbr.rel (0) target = $region16
      $region15: #{tpu_custom_call.1} parent=5 // pred_region
        %s37 = ssub.s32 2, 1
        loop: start=0, step=1, limit=1
        $region17: #{tpu_custom_call.1} parent=15 // loop_pre_header
          _
        $region18: #{tpu_custom_call.1} parent=15 // loop_header
          %s39 = sphi 0, %s43
          %p40 = scmp.ge.s32.totalorder %s39, 1
          %s44 = sphi %s29, %s29
          %s45 = sphi %s30, %s30
        $region19: #{tpu_custom_call.1} parent=15 // loop_header_branch
          %42 = sbr.rel (%p40) target = $region23
        $region20: #{tpu_custom_call.1} parent=15 // loop_body
          %v46 = vld [vmem:[%s44] sm:%s37]
          %47 = vst [vmem:[%s45] sm:%s37] %v46
        $region21: #{tpu_custom_call.1} parent=15 // loop_footer
          %s43 = sadd.s32 1, %s39
        $region22: #{tpu_custom_call.1} parent=15 // loop_footer_branch
          %38 = sbr.rel target = $region18
        $region23: #{tpu_custom_call.1} parent=15 // loop_exit
          _
      $region16: #{tpu_custom_call.1} parent=5 // pred_fallthru
        _
      // Predicated region
      $region35: #{tpu_custom_call.1} parent=5 // pred_check
        _
      $region36: #{tpu_custom_call.1} parent=5 // pred_check_branch
        %64 = sbr.rel (0) target = $region38
      $region37: #{tpu_custom_call.1} parent=5 // pred_region
        %65 = vsyncadd %s31, 16
      $region38: #{tpu_custom_call.1} parent=5 // pred_fallthru
        _
    $region6: #{tpu_custom_call.1} parent=1 // loop_footer
      %s22 = sadd.s32 1, %s18
    $region7: #{tpu_custom_call.1} parent=1 // loop_footer_branch
      %17 = sbr.rel target = $region3
    $region8: #{tpu_custom_call.1} parent=1 // loop_exit
      _
    loop: start=0, step=1, limit=16
    $region39: #{tpu_custom_call.1} parent=1 // loop_pre_header
      _
    $region40: #{tpu_custom_call.1} parent=1 // loop_header
      %s67 = sphi 0, %s71
      %p68 = scmp.ge.s32.totalorder %s67, 16
    $region41: #{tpu_custom_call.1} parent=1 // loop_header_branch
      %70 = sbr.rel (%p68) target = $region45
    $region42: #{tpu_custom_call.1} parent=1 // loop_body
      %s72 = sadd.s32 %s16, %s67
      %s73 = sld [smem:[#allocation5 + %s72]]
      %s74 = scalar_lea.sflag [#allocation3], %s67
      %s75 = smul.u32 1, 1
      %s76 = sshll.u32 %s75, 4
      %77 = dma.done %s74, %s76
    $region43: #{tpu_custom_call.1} parent=1 // loop_footer
      %s71 = sadd.s32 1, %s67
    $region44: #{tpu_custom_call.1} parent=1 // loop_footer_branch
      %66 = sbr.rel target = $region40
    $region45: #{tpu_custom_call.1} parent=1 // loop_exit
      _
    %v78 = vld [vmem:[#allocation2] sm:$0xff]
    %v79 = vld [vmem:[#allocation2 + $0x8] sm:$0xff]
    %v80 = vmul.f32 %v78, 5.656854
    %v81 = vmul.f32 %v79, 5.656854
    %vm82 = vcmask 261120
    %83 = vst.msk [vmem:[#allocation6] sm:$0xff] %vm82, %v80
    %84 = vst.msk [vmem:[#allocation6 + $0x8] sm:$0xff] %vm82, %v81
    // Predicated region
    $region46: #{tpu_custom_call.1} parent=1 // pred_check
      _
    $region47: #{tpu_custom_call.1} parent=1 // pred_check_branch
      %86 = sbr.rel (0) target = $region49
    $region48: #{tpu_custom_call.1} parent=1 // pred_region
      %88 = vsyncadd [#allocation7], 0
      %s89 = sshll.u32 [#allocation6], 4
      %s90 = int_to_ptr.vmem [resolvable:$true] %s89
      %s91 = sshll.u32 %s2, 4
      %s92 = int_to_ptr.hbm [resolvable:$true] %s91
      %97 = dma.vmem_to_hbm [thread:$0]  %s90, 256, %s92, [#allocation7], 128, 128, 8
    $region49: #{tpu_custom_call.1} parent=1 // pred_fallthru
      _
    // Predicated region
    $region50: #{tpu_custom_call.1} parent=1 // pred_check
      _
    $region51: #{tpu_custom_call.1} parent=1 // pred_check_branch
      %99 = sbr.rel (0) target = $region53
    $region52: #{tpu_custom_call.1} parent=1 // pred_region
      %101 = dma.done [#allocation7], 256
    $region53: #{tpu_custom_call.1} parent=1 // pred_fallthru
      _
    %102 = vsyncpa [#allocation7], 1
  %103 = vsyncmov [#allocation3]
  %s104 = vpop.sfrf %103
  %p105 = scmp.eq.s32.totalorder %s104, 0
  %p106 = pneg %p105
  %108 = shalt.err (%p106)
  %s109 = scalar_lea.sflag [#allocation3], 1
  %110 = vsyncmov %s109
  %s111 = vpop.sfrf %110
  %p112 = scmp.eq.s32.totalorder %s111, 0
  %p113 = pneg %p112
  %115 = shalt.err (%p113)
  %s116 = scalar_lea.sflag [#allocation3], 2
  %117 = vsyncmov %s116
  %s118 = vpop.sfrf %117
  %p119 = scmp.eq.s32.totalorder %s118, 0
  %p120 = pneg %p119
  %122 = shalt.err (%p120)
  %s123 = scalar_lea.sflag [#allocation3], 3
  %124 = vsyncmov %s123
  %s125 = vpop.sfrf %124
  %p126 = scmp.eq.s32.totalorder %s125, 0
  %p127 = pneg %p126
  %129 = shalt.err (%p127)
  %s130 = scalar_lea.sflag [#allocation3], 4
  %131 = vsyncmov %s130
  %s132 = vpop.sfrf %131
  %p133 = scmp.eq.s32.totalorder %s132, 0
  %p134 = pneg %p133
  %136 = shalt.err (%p134)
  %s137 = scalar_lea.sflag [#allocation3], 5
  %138 = vsyncmov %s137
  %s139 = vpop.sfrf %138
  %p140 = scmp.eq.s32.totalorder %s139, 0
  %p141 = pneg %p140
  %143 = shalt.err (%p141)
  %s144 = scalar_lea.sflag [#allocation3], 6
  %145 = vsyncmov %s144
  %s146 = vpop.sfrf %145
  %p147 = scmp.eq.s32.totalorder %s146, 0
  %p148 = pneg %p147
  %150 = shalt.err (%p148)
  %s151 = scalar_lea.sflag [#allocation3], 7
  %152 = vsyncmov %s151
  %s153 = vpop.sfrf %152
  %p154 = scmp.eq.s32.totalorder %s153, 0
  %p155 = pneg %p154
  %157 = shalt.err (%p155)
  %s158 = scalar_lea.sflag [#allocation3], 8
  %159 = vsyncmov %s158
  %s160 = vpop.sfrf %159
  %p161 = scmp.eq.s32.totalorder %s160, 0
  %p162 = pneg %p161
  %164 = shalt.err (%p162)
  %s165 = scalar_lea.sflag [#allocation3], 9
  %166 = vsyncmov %s165
  %s167 = vpop.sfrf %166
  %p168 = scmp.eq.s32.totalorder %s167, 0
  %p169 = pneg %p168
  %171 = shalt.err (%p169)
  %s172 = scalar_lea.sflag [#allocation3], 10
  %173 = vsyncmov %s172
  %s174 = vpop.sfrf %173
  %p175 = scmp.eq.s32.totalorder %s174, 0
  %p176 = pneg %p175
  %178 = shalt.err (%p176)
  %s179 = scalar_lea.sflag [#allocation3], 11
  %180 = vsyncmov %s179
  %s181 = vpop.sfrf %180
  %p182 = scmp.eq.s32.totalorder %s181, 0
  %p183 = pneg %p182
  %185 = shalt.err (%p183)
  %s186 = scalar_lea.sflag [#allocation3], 12
  %187 = vsyncmov %s186
  %s188 = vpop.sfrf %187
  %p189 = scmp.eq.s32.totalorder %s188, 0
  %p190 = pneg %p189
  %192 = shalt.err (%p190)
  %s193 = scalar_lea.sflag [#allocation3], 13
  %194 = vsyncmov %s193
  %s195 = vpop.sfrf %194
  %p196 = scmp.eq.s32.totalorder %s195, 0
  %p197 = pneg %p196
  %199 = shalt.err (%p197)
  %s200 = scalar_lea.sflag [#allocation3], 14
  %201 = vsyncmov %s200
  %s202 = vpop.sfrf %201
  %p203 = scmp.eq.s32.totalorder %s202, 0
  %p204 = pneg %p203
  %206 = shalt.err (%p204)
  %s207 = scalar_lea.sflag [#allocation3], 15
  %208 = vsyncmov %s207
  %s209 = vpop.sfrf %208
  %p210 = scmp.eq.s32.totalorder %s209, 0
  %p211 = pneg %p210
  %213 = shalt.err (%p211)

</llo_original>
